<compile_context>
chip_gen: v5e
topology: v5e:2x2
jax: 0.10.0
libtpu: 0.0.40
codegen_flags: <defaults>
</compile_context>

<pallas_src>
import math

import jax
import jax.numpy as jnp
from jax.experimental import pallas as pl
from jax.experimental.pallas import tpu as pltpu


# ---------------------------------------------------------------------------
# Kernel 1: fused, batched self-attention (packed QKV projection + softmax +
#           attn @ V) over Bblk batches per grid step.
# ---------------------------------------------------------------------------
def _attention_kernel(x_ref, wqkv_ref, bqkv_ref, xatt_ref, attn_ref):
    bblk, S, D = x_ref.shape

    # One big (Bblk*S, D) @ (D, 3D) projection -> much better MXU row usage.
    x2 = x_ref[...].reshape(bblk * S, D)                          # (64, 128)
    qkv = jnp.dot(x2, wqkv_ref[...],
                  preferred_element_type=jnp.float32) + bqkv_ref[...]

    q = qkv[:, 0 * D:1 * D].reshape(bblk, S, D)
    k = qkv[:, 1 * D:2 * D].reshape(bblk, S, D)
    v = qkv[:, 2 * D:3 * D].reshape(bblk, S, D)

    # Batched q @ k^T without materializing the transpose of k.
    scores = jnp.einsum("bqd,bkd->bqk", q, k,
                        preferred_element_type=jnp.float32)       # (Bblk,S,S)
    scores = scores * (1.0 / math.sqrt(D))

    # Numerically stable softmax along the key axis (exact divide: attention
    # matrix is a checked/returned output).
    m = jnp.max(scores, axis=-1, keepdims=True)
    p = jnp.exp(scores - m)
    l = jnp.sum(p, axis=-1, keepdims=True)
    attn = p / l

    o = jnp.einsum("bqk,bkd->bqd", attn, v,
                   preferred_element_type=jnp.float32)            # (Bblk,S,D)

    xatt_ref[...] = o.astype(xatt_ref.dtype)
    attn_ref[...] = attn.astype(attn_ref.dtype)


def self_attention(x, wqkv, bqkv, *, bblk):
    B, S, D = x.shape
    assert B % bblk == 0

    return pl.pallas_call(
        _attention_kernel,
        out_shape=(jax.ShapeDtypeStruct((B, S, D), jnp.bfloat16),
                   jax.ShapeDtypeStruct((B, S, S), jnp.float32)),
        grid_spec=pltpu.PrefetchScalarGridSpec(
            num_scalar_prefetch=0,
            grid=(B // bblk,),
            in_specs=[pl.BlockSpec((bblk, S, D), lambda b: (b, 0, 0)),
                      pl.BlockSpec((D, 3 * D), lambda b: (0, 0)),
                      pl.BlockSpec((1, 3 * D), lambda b: (0, 0))],
            out_specs=[pl.BlockSpec((bblk, S, D), lambda b: (b, 0, 0)),
                       pl.BlockSpec((bblk, S, S), lambda b: (b, 0, 0))],
        ),
        compiler_params=pltpu.CompilerParams(
            dimension_semantics=("parallel",)),
    )(x, wqkv, bqkv)


# ---------------------------------------------------------------------------
# Kernel 2: fully fused MLP.
#   Layer 1 consumes x_att (B, S, D) directly: its weight was permuted at init
#   into (S, D, W0) so that   sum_s x_att[:, s, :] @ W1_3d[s]
#   equals   feature_major_flatten(x_att) @ W1.
#   All weights are bf16 (f32 accumulation); single grid step, no scratch.
# ---------------------------------------------------------------------------
def _fused_mlp_kernel(xatt_ref, *args):
    out_ref = args[-1]
    w1_ref, b1_ref = args[0], args[1]
    rest = args[2:-1]                                   # (w, b) pairs

    Bm, S, _D = xatt_ref.shape

    # ---- Layer 1: (B, S*D) @ (S*D, W0), expressed as a sum over s.
    acc = jnp.zeros((Bm, w1_ref.shape[-1]), jnp.float32)
    for s in range(S):
        xs = xatt_ref[:, s, :].astype(jnp.bfloat16)     # (B, D)
        acc = acc + jnp.dot(xs, w1_ref[s],
                            preferred_element_type=jnp.float32)
    h = jnp.maximum(acc + b1_ref[...], 0.0)

    # ---- Remaining layers (ReLU on all but the last).
    n_rest = len(rest) // 2
    for i in range(n_rest):
        w_ref, b_ref = rest[2 * i], rest[2 * i + 1]
        z = jnp.dot(h.astype(jnp.bfloat16), w_ref[...],
                    preferred_element_type=jnp.float32) + b_ref[...]
        h = jnp.maximum(z, 0.0) if i < n_rest - 1 else z

    out_ref[...] = h.astype(out_ref.dtype)


def _full_block(a):
    nd = a.ndim
    return pl.BlockSpec(a.shape, lambda i, nd=nd: (0,) * nd)


def fused_mlp(x_att, params):
    """params: [(w1_3d_bf16, b1_f32), (w_bf16, b_f32), ..., (w_out, b_out)]."""
    B = x_att.shape[0]
    out_dim = params[-1][1].shape[-1]
    flat = [p for wb in params for p in wb]

    return pl.pallas_call(
        _fused_mlp_kernel,
        out_shape=jax.ShapeDtypeStruct((B, out_dim), jnp.float32),
        grid_spec=pltpu.PrefetchScalarGridSpec(
            num_scalar_prefetch=0,
            grid=(1,),
            in_specs=[_full_block(x_att)] + [_full_block(p) for p in flat],
            out_specs=pl.BlockSpec((B, out_dim), lambda i: (0, 0)),
        ),
        compiler_params=pltpu.CompilerParams(
            dimension_semantics=("arbitrary",)),
    )(x_att, *flat)


# ---------------------------------------------------------------------------
# Model wrapper (mirrors the PyTorch SelfAttMLP module structure).
# ---------------------------------------------------------------------------
class SelfAttMLP:
    def __init__(self, key, *, input_size, seq_len, width, output_size):
        self.input_size = input_size
        self.seq_len = seq_len
        D, S = input_size, seq_len

        keys = jax.random.split(key, 3 + len(width) + 1)

        def init_linear(k, fan_in, fan_out):
            kw, kb = jax.random.split(k)
            w = (jax.random.normal(kw, (fan_in, fan_out), jnp.float32)
                 / jnp.sqrt(jnp.float32(fan_in)))
            b = jax.random.normal(kb, (fan_out,), jnp.float32) * 0.01
            return w, b

        # --- Attention projections, packed into one (D, 3D) weight (f32).
        wq, bq = init_linear(keys[0], D, D)
        wk, bk = init_linear(keys[1], D, D)
        wv, bv = init_linear(keys[2], D, D)
        self.wqkv = jnp.concatenate([wq, wk, wv], axis=1)            # (D, 3D)
        self.bqkv = jnp.concatenate([bq, bk, bv]).reshape(1, 3 * D)  # (1, 3D)

        # --- MLP layers. Weights stored as bf16 (the canonical parameters).
        dims = [D * S] + list(width) + [output_size]
        self.mlp_layers = []          # original (fan_in, fan_out) layout
        for i, (fi, fo) in enumerate(zip(dims[:-1], dims[1:])):
            w, b = init_linear(keys[3 + i], fi, fo)
            self.mlp_layers.append((w.astype(jnp.bfloat16), b))

        # Kernel-side params: first-layer rows permuted so that the kernel can
        # consume x_att (B, S, D) without the transpose/flatten:
        #   w1_3d[s, d, :] == w1[d*S + s, :]   (PyTorch flatten is d*S + s).
        w1_bf, b1 = self.mlp_layers[0]
        w1_3d = w1_bf.reshape(D, S, dims[1]).transpose(1, 0, 2)      # (S, D, W0)
        self.mlp_kernel_params = [(w1_3d, b1.reshape(1, -1))]
        for w_bf, b in self.mlp_layers[1:]:
            self.mlp_kernel_params.append((w_bf, b.reshape(1, -1)))

        self.bblk = 4 if (dims and True) and ((D * 0 + 1) and True) else 4

    def forward(self, x):
        B = x.shape[0]
        bblk = self.bblk if B % self.bblk == 0 else 1
        x_att, attention = self_attention(x, self.wqkv, self.bqkv, bblk=bblk)
        out = fused_mlp(x_att, self.mlp_kernel_params)
        return out, attention

    def __call__(self, x):
        return self.forward(x)


# ---------------------------------------------------------------------------
# Pure-JAX reference (for correctness verification). Uses the same bf16-stored
# MLP weights (upcast to f32) and the original feature-major flatten.
# ---------------------------------------------------------------------------
def reference_forward(model, x):
    D = x.shape[-1]
    wq, wk, wv = (model.wqkv[:, i * D:(i + 1) * D] for i in range(3))
    bq, bk, bv = (model.bqkv[0, i * D:(i + 1) * D] for i in range(3))
    q = jnp.einsum("bsd,de->bse", x, wq) + bq
    k = jnp.einsum("bsd,de->bse", x, wk) + bk
    v = jnp.einsum("bsd,de->bse", x, wv) + bv
    scores = jnp.einsum("bqd,bkd->bqk", q, k) / math.sqrt(D)
    attn = jax.nn.softmax(scores, axis=-1)
    x_att = jnp.einsum("bqk,bkd->bqd", attn, v)
    x_flat = jnp.transpose(x_att, (0, 2, 1)).reshape(x.shape[0], -1)
    h = x_flat
    for w, b in model.mlp_layers[:-1]:
        h = jnp.maximum(h @ w.astype(jnp.float32) + b, 0.0)
    w, b = model.mlp_layers[-1]
    out = h @ w.astype(jnp.float32) + b
    return out, attn


if __name__ == "__main__":
    key = jax.random.PRNGKey(0)
    k_param, k_x = jax.random.split(key)

    # Small but lane-dense shapes: feature dims are multiples of 128,
    # row dims multiples of 8.
    B, S, D = 8, 16, 128          # batch, seq_len, input_size
    width = (256, 256)            # MLP hidden widths (depth = 2)
    output_size = 128

    model = SelfAttMLP(k_param, input_size=D, seq_len=S, width=width,
                       output_size=output_size)
    x = jax.random.normal(k_x, (B, S, D), dtype=jnp.float32)

    out, attn = model(x)
    out, attn = jax.block_until_ready((out, attn))

    out_ref, attn_ref = reference_forward(model, x)

    assert out.shape == (B, output_size) and out.dtype == jnp.float32
    assert attn.shape == (B, S, S) and attn.dtype == jnp.float32
    assert bool(jnp.allclose(attn, attn_ref, rtol=2e-2, atol=2e-2))
    assert bool(jnp.allclose(out, out_ref, rtol=2e-2, atol=2e-2))
    print("KERNEL_OK")
</pallas_src>

<mosaic_0001>
module attributes {stable_mosaic.version = 11 : i64} {
  func.func @_attention_kernel(%arg0: i32, %arg1: memref<4x16x128xf32, #tpu.memory_space<vmem>>, %arg2: memref<128x384xf32, #tpu.memory_space<vmem>>, %arg3: memref<1x384xf32, #tpu.memory_space<vmem>>, %arg4: memref<4x16x128xbf16, #tpu.memory_space<vmem>>, %arg5: memref<4x16x16xf32, #tpu.memory_space<vmem>>) attributes {dimension_semantics = [#tpu.dimension_semantics<parallel>], iteration_bounds = array<i64: 2>, scalar_prefetch = 0 : i64, scratch_operands = 0 : i64, tpu.core_type = #tpu.core_type<tc>, window_params = [{transform_indices = @transform_0, window_bounds = array<i64: 4, 16, 128>}, {pipeline_mode = #tpu.pipeline_mode<synchronous>, transform_indices = @transform_1, window_bounds = array<i64: 128, 384>}, {pipeline_mode = #tpu.pipeline_mode<synchronous>, transform_indices = @transform_2, window_bounds = array<i64: 1, 384>}, {transform_indices = @transform_3, window_bounds = array<i64: 4, 16, 128>}, {transform_indices = @transform_4, window_bounds = array<i64: 4, 16, 16>}]} {
    %c0 = arith.constant 0 : index
    %c0_0 = arith.constant 0 : index
    %c0_1 = arith.constant 0 : index
    %0 = vector.load %arg1[%c0, %c0_0, %c0_1] : memref<4x16x128xf32, #tpu.memory_space<vmem>>, vector<4x16x128xf32>
    %1 = vector.shape_cast %0 : vector<4x16x128xf32> to vector<64x128xf32>
    %c0_2 = arith.constant 0 : index
    %c0_3 = arith.constant 0 : index
    %2 = vector.load %arg2[%c0_2, %c0_3] : memref<128x384xf32, #tpu.memory_space<vmem>>, vector<128x384xf32>
    %cst = arith.constant dense<0.000000e+00> : vector<64x384xf32>
    %3 = tpu.matmul %1, %2, %cst {dimension_numbers = #tpu.dot_dimension_numbers<[1], [0], [0], [1], [0, 0, 1, 1], [], []>} : vector<64x128xf32>, vector<128x384xf32>, vector<64x384xf32> -> vector<64x384xf32>
    %c0_4 = arith.constant 0 : index
    %c0_5 = arith.constant 0 : index
    %4 = vector.load %arg3[%c0_4, %c0_5] : memref<1x384xf32, #tpu.memory_space<vmem>>, vector<1x384xf32>
    %5 = vector.broadcast %4 : vector<1x384xf32> to vector<64x384xf32>
    %6 = arith.addf %3, %5 : vector<64x384xf32>
    %7 = vector.extract_strided_slice %6 {offsets = [0, 0], sizes = [64, 128], strides = [1, 1]} : vector<64x384xf32> to vector<64x128xf32>
    %8 = vector.shape_cast %7 : vector<64x128xf32> to vector<4x16x128xf32>
    %9 = vector.extract_strided_slice %6 {offsets = [0, 128], sizes = [64, 128], strides = [1, 1]} : vector<64x384xf32> to vector<64x128xf32>
    %10 = vector.shape_cast %9 : vector<64x128xf32> to vector<4x16x128xf32>
    %11 = vector.extract_strided_slice %6 {offsets = [0, 256], sizes = [64, 128], strides = [1, 1]} : vector<64x384xf32> to vector<64x128xf32>
    %12 = vector.shape_cast %11 : vector<64x128xf32> to vector<4x16x128xf32>
    "tpu.trace_start"() <{level = 10 : i32, message = "bqd,bkd->bqk"}> : () -> ()
    %cst_6 = arith.constant dense<0.000000e+00> : vector<4x16x16xf32>
    %13 = tpu.matmul %8, %10, %cst_6 {dimension_numbers = #tpu.dot_dimension_numbers<[2], [2], [1], [1], [0, 0, 0, 1, 1, 1], [0], [0]>} : vector<4x16x128xf32>, vector<4x16x128xf32>, vector<4x16x16xf32> -> vector<4x16x16xf32>
    "tpu.trace_stop"() : () -> ()
    %cst_7 = arith.constant 0.0883883461 : f32
    %14 = vector.broadcast %cst_7 : f32 to vector<4x16x16xf32>
    %15 = arith.mulf %13, %14 : vector<4x16x16xf32>
    %cst_8 = arith.constant dense<0xFF800000> : vector<4x16xf32>
    %16 = vector.multi_reduction <maximumf>, %15, %cst_8 [2] : vector<4x16x16xf32> to vector<4x16xf32>
    %17 = vector.shape_cast %16 : vector<4x16xf32> to vector<4x16x1xf32>
    %18 = vector.broadcast %17 : vector<4x16x1xf32> to vector<4x16x16xf32>
    %19 = arith.subf %15, %18 : vector<4x16x16xf32>
    %20 = math.exp %19 : vector<4x16x16xf32>
    %cst_9 = arith.constant dense<0.000000e+00> : vector<4x16xf32>
    %21 = vector.multi_reduction <add>, %20, %cst_9 [2] : vector<4x16x16xf32> to vector<4x16xf32>
    %22 = vector.shape_cast %21 : vector<4x16xf32> to vector<4x16x1xf32>
    %23 = vector.broadcast %22 : vector<4x16x1xf32> to vector<4x16x16xf32>
    %24 = arith.divf %20, %23 : vector<4x16x16xf32>
    "tpu.trace_start"() <{level = 10 : i32, message = "bqk,bkd->bqd"}> : () -> ()
    %cst_10 = arith.constant dense<0.000000e+00> : vector<4x16x128xf32>
    %25 = tpu.matmul %24, %12, %cst_10 {dimension_numbers = #tpu.dot_dimension_numbers<[2], [1], [1], [2], [0, 0, 0, 1, 1, 2], [0], [0]>} : vector<4x16x16xf32>, vector<4x16x128xf32>, vector<4x16x128xf32> -> vector<4x16x128xf32>
    "tpu.trace_stop"() : () -> ()
    %26 = arith.truncf %25 : vector<4x16x128xf32> to vector<4x16x128xbf16>
    %c0_11 = arith.constant 0 : index
    %c0_12 = arith.constant 0 : index
    %c0_13 = arith.constant 0 : index
    %27 = vector.load %arg4[%c0_11, %c0_12, %c0_13] : memref<4x16x128xbf16, #tpu.memory_space<vmem>>, vector<4x16x128xbf16>
    tpu.vector_store %arg4[%c0_11, %c0_12, %c0_13], %26 {strides = array<i32>} : memref<4x16x128xbf16, #tpu.memory_space<vmem>>, vector<4x16x128xbf16>,
    %c0_14 = arith.constant 0 : index
    %c0_15 = arith.constant 0 : index
    %c0_16 = arith.constant 0 : index
    %28 = vector.load %arg5[%c0_14, %c0_15, %c0_16] : memref<4x16x16xf32, #tpu.memory_space<vmem>>, vector<4x16x16xf32>
    tpu.vector_store %arg5[%c0_14, %c0_15, %c0_16], %24 {strides = array<i32>} : memref<4x16x16xf32, #tpu.memory_space<vmem>>, vector<4x16x16xf32>,
    return
  }
  func.func @transform_0(%arg0: i32) -> (i32, i32, i32) {
    %c0_i32 = arith.constant 0 : i32
    %c0_i32_0 = arith.constant 0 : i32
    %c0_i32_1 = arith.constant 0 : i32
    return %arg0, %c0_i32, %c0_i32_0 : i32, i32, i32
  }
  func.func @transform_1(%arg0: i32) -> (i32, i32) {
    %c0_i32 = arith.constant 0 : i32
    %c0_i32_0 = arith.constant 0 : i32
    %c0_i32_1 = arith.constant 0 : i32
    return %c0_i32, %c0_i32_0 : i32, i32
  }
  func.func @transform_2(%arg0: i32) -> (i32, i32) {
    %c0_i32 = arith.constant 0 : i32
    %c0_i32_0 = arith.constant 0 : i32
    %c0_i32_1 = arith.constant 0 : i32
    return %c0_i32, %c0_i32_0 : i32, i32
  }
  func.func @transform_3(%arg0: i32) -> (i32, i32, i32) {
    %c0_i32 = arith.constant 0 : i32
    %c0_i32_0 = arith.constant 0 : i32
    %c0_i32_1 = arith.constant 0 : i32
    return %arg0, %c0_i32, %c0_i32_0 : i32, i32, i32
  }
  func.func @transform_4(%arg0: i32) -> (i32, i32, i32) {
    %c0_i32 = arith.constant 0 : i32
    %c0_i32_0 = arith.constant 0 : i32
    %c0_i32_1 = arith.constant 0 : i32
    return %arg0, %c0_i32, %c0_i32_0 : i32, i32, i32
  }
}

</mosaic_0001>

<llo_original>
// kernel: tpu_custom_call.1
$region0: #{tpu_custom_call.1}
  #allocation0 [shape = 'u32[]', space=smem, size = 0x4, offset = 0x4, fixed_abs, tag = 'smem constant byte address 0x4 - core index']
  #allocation1 [shape = 'u32[72,128]{1,0:T(1,128)}', space=vmem, size = 0x9000, scoped, tag = 'internal scratch']
  %s0 = inlined_call_operand.hbm [shape: f32[8,16,128], index: 0, kind: input, shape index: {}]
  %s1 = inlined_call_operand.hbm [shape: f32[128,384], index: 1, kind: input, shape index: {}]
  %s2 = inlined_call_operand.hbm [shape: f32[1,384], index: 2, kind: input, shape index: {}]
  %s3 = inlined_call_operand.hbm [shape: bf16[8,16,128], index: 3, kind: output, shape index: {0}]
  %s4 = inlined_call_operand.hbm [shape: f32[8,16,16], index: 4, kind: output, shape index: {1}]
  %5 = xla_tuple %s3, %s4
  %s6 = sld [smem:[#allocation0]]
  $region65: #{tpu_custom_call.1} parent=0
    _
  %s8 = ssub.s32 1, %s6
  %s9 = scalar_select 0, %s8, %s6
  $region1: #{tpu_custom_call.1} parent=0
    #allocation2 [shape = 'u8[65536]{0}', space=vmem, size = 0x10000, scoped, tag = 'input window, operand 0']
    #allocation3 [shape = 's32[2]{0}', space=sflag, size = 0x8, scoped, tag = 'scoped memory for tpu_custom_call.1']
    #allocation4 [shape = 's32[2]{0}', space=sflag, size = 0x8, scoped, tag = 'scoped memory for tpu_custom_call.1']
    #allocation5 [shape = 'u8[196608]{0}', space=vmem, size = 0x30000, scoped, tag = 'input window, operand 1, single buffered']
    #allocation6 [shape = 's32[1]{0}', space=sflag, size = 0x4, scoped, tag = 'scoped memory for tpu_custom_call.1']
    #allocation7 [shape = 'u8[1536]{0}', space=vmem, size = 0x800, scoped, tag = 'input window, operand 2, single buffered']
    #allocation8 [shape = 'u8[32768]{0}', space=vmem, size = 0x8000, scoped, tag = 'output window, operand 0']
    #allocation9 [shape = 'u8[65536]{0}', space=vmem, size = 0x10000, scoped, tag = 'output window, operand 1']
    #allocation10 [shape = 's32[2]{0}', space=sflag, size = 0x8, scoped, tag = 'scoped memory for tpu_custom_call.1']
    %10 = vsyncpa [#allocation3], 0
    %s11 = scalar_lea.sflag [#allocation3], 1
    %12 = vsyncpa %s11, 0
    %13 = vsyncpa [#allocation6], 0
    %14 = vsyncpa [#allocation4], 0
    %s15 = scalar_lea.sflag [#allocation4], 1
    %16 = vsyncpa %s15, 0
    %17 = vsyncpa [#allocation10], 0
    %s18 = scalar_lea.sflag [#allocation10], 1
    %19 = vsyncpa %s18, 0
    loop: start=0, step=1, limit=4
    $region2: #{tpu_custom_call.1} parent=1 // loop_pre_header
      _
    $region3: #{tpu_custom_call.1} parent=1 // loop_header
      %s21 = sphi 0, %s25
      %p22 = scmp.ge.s32.totalorder %s21, 4
      %s31 = sphi 0, %s33
      %s34 = sphi 0, %s31
      %s35 = sphi 0, %s34
      %s51 = sphi 0, %s35
      %s55 = sphi 0, %s55
      %s57 = sphi 0, %s55
      %s58 = sphi 0, %s57
      %s72 = sphi 0, %s58
      %s76 = sphi 0, %s76
      %s78 = sphi 0, %s76
      %s79 = sphi 0, %s78
      %s93 = sphi 0, %s79
      %s99 = sphi 0, %s101
      %s102 = sphi 0, %s99
      %s103 = sphi 0, %s102
      %s119 = sphi 0, %s103
      %s125 = sphi 0, %s127
      %s128 = sphi 0, %s125
      %s129 = sphi 0, %s128
      %s145 = sphi 0, %s129
    $region4: #{tpu_custom_call.1} parent=1 // loop_header_branch
      %24 = sbr.rel (%p22) target = $region8
    $region5: #{tpu_custom_call.1} parent=1 // loop_body
      %s26 = ssub.s32 %s21, 1
      %s27 = ssub.s32 %s21, 2
      %s28 = sadd.s32 %s21, 1
      %s29 = ssub.s32 %s21, %s28
      %p30 = scmp.eq.s32.totalorder %s29, 0
      %s32 = sadd.s32 %s31, 1
      %s33 = scalar_select %p30, %s31, %s32
      %p36 = pneg %p30
      %p37 = scmp.eq.s32.totalorder %s21, 1
      %p38 = por %p36, %p37
      %p39 = scmp.ne.s32.totalorder %s31, %s34
      %p40 = scmp.eq.s32.totalorder %s21, 0
      %p41 = por %p39, %p40
      %p42 = scmp.ne.s32.totalorder %s31, %s34
      %p43 = scmp.eq.s32.totalorder %s26, 1
      %p44 = por %p42, %p43
      %p45 = scmp.ne.s32.totalorder %s34, %s35
      %p46 = scmp.eq.s32.totalorder %s26, 0
      %p47 = por %p45, %p46
      %p48 = scmp.ne.s32.totalorder %s34, %s35
      %p49 = scmp.eq.s32.totalorder %s27, 1
      %p50 = por %p48, %p49
      %p52 = scmp.ne.s32.totalorder %s35, %s51
      %p53 = scmp.eq.s32.totalorder %s27, 0
      %p54 = por %p52, %p53
      %s56 = sadd.s32 %s55, 1
      %p59 = scmp.eq.s32.totalorder %s21, 1
      %p60 = scmp.ne.s32.totalorder %s55, %s57
      %p61 = scmp.eq.s32.totalorder %s21, 0
      %p62 = por %p60, %p61
      %p63 = scmp.ne.s32.totalorder %s55, %s57
      %p64 = scmp.eq.s32.totalorder %s26, 1
      %p65 = por %p63, %p64
      %p66 = scmp.ne.s32.totalorder %s57, %s58
      %p67 = scmp.eq.s32.totalorder %s26, 0
      %p68 = por %p66, %p67
      %p69 = scmp.ne.s32.totalorder %s57, %s58
      %p70 = scmp.eq.s32.totalorder %s27, 1
      %p71 = por %p69, %p70
      %p73 = scmp.ne.s32.totalorder %s58, %s72
      %p74 = scmp.eq.s32.totalorder %s27, 0
      %p75 = por %p73, %p74
      %s77 = sadd.s32 %s76, 1
      %p80 = scmp.eq.s32.totalorder %s21, 1
      %p81 = scmp.ne.s32.totalorder %s76, %s78
      %p82 = scmp.eq.s32.totalorder %s21, 0
      %p83 = por %p81, %p82
      %p84 = scmp.ne.s32.totalorder %s76, %s78
      %p85 = scmp.eq.s32.totalorder %s26, 1
      %p86 = por %p84, %p85
      %p87 = scmp.ne.s32.totalorder %s78, %s79
      %p88 = scmp.eq.s32.totalorder %s26, 0
      %p89 = por %p87, %p88
      %p90 = scmp.ne.s32.totalorder %s78, %s79
      %p91 = scmp.eq.s32.totalorder %s27, 1
      %p92 = por %p90, %p91
      %p94 = scmp.ne.s32.totalorder %s79, %s93
      %p95 = scmp.eq.s32.totalorder %s27, 0
      %p96 = por %p94, %p95
      %s97 = ssub.s32 %s21, %s28
      %p98 = scmp.eq.s32.totalorder %s97, 0
      %s100 = sadd.s32 %s99, 1
      %s101 = scalar_select %p98, %s99, %s100
      %p104 = pneg %p98
      %p105 = scmp.eq.s32.totalorder %s21, 1
      %p106 = por %p104, %p105
      %p107 = scmp.ne.s32.totalorder %s99, %s102
      %p108 = scmp.eq.s32.totalorder %s21, 0
      %p109 = por %p107, %p108
      %p110 = scmp.ne.s32.totalorder %s99, %s102
      %p111 = scmp.eq.s32.totalorder %s26, 1
      %p112 = por %p110, %p111
      %p113 = scmp.ne.s32.totalorder %s102, %s103
      %p114 = scmp.eq.s32.totalorder %s26, 0
      %p115 = por %p113, %p114
      %p116 = scmp.ne.s32.totalorder %s102, %s103
      %p117 = scmp.eq.s32.totalorder %s27, 1
      %p118 = por %p116, %p117
      %p120 = scmp.ne.s32.totalorder %s103, %s119
      %p121 = scmp.eq.s32.totalorder %s27, 0
      %p122 = por %p120, %p121
      %s123 = ssub.s32 %s21, %s28
      %p124 = scmp.eq.s32.totalorder %s123, 0
      %s126 = sadd.s32 %s125, 1
      %s127 = scalar_select %p124, %s125, %s126
      %p130 = pneg %p124
      %p131 = scmp.eq.s32.totalorder %s21, 1
      %p132 = por %p130, %p131
      %p133 = scmp.ne.s32.totalorder %s125, %s128
      %p134 = scmp.eq.s32.totalorder %s21, 0
      %p135 = por %p133, %p134
      %p136 = scmp.ne.s32.totalorder %s125, %s128
      %p137 = scmp.eq.s32.totalorder %s26, 1
      %p138 = por %p136, %p137
      %p139 = scmp.ne.s32.totalorder %s128, %s129
      %p140 = scmp.eq.s32.totalorder %s26, 0
      %p141 = por %p139, %p140
      %p142 = scmp.ne.s32.totalorder %s128, %s129
      %p143 = scmp.eq.s32.totalorder %s27, 1
      %p144 = por %p142, %p143
      %p146 = scmp.ne.s32.totalorder %s129, %s145
      %p147 = scmp.eq.s32.totalorder %s27, 0
      %p148 = por %p146, %p147
      %p149 = scmp.le.s32.totalorder 1, %s21
      %p150 = scmp.lt.s32.totalorder %s21, 3
      %p151 = pnand %p149, %p150
      %p152 = pneg %p151
      // Predicated region
      $region9: #{tpu_custom_call.1} parent=5 // pred_check
        _
      $region10: #{tpu_custom_call.1} parent=5 // pred_check_branch
        %154 = sbr.rel (%p151) target = $region12
      $region11: #{tpu_custom_call.1} parent=5 // pred_region
        %s155 = ssub.s32 %s21, 1
        // Predicated region
        $region13: #{tpu_custom_call.1} parent=11 // pred_check
          %p156 = pneg %p68
        $region14: #{tpu_custom_call.1} parent=11 // pred_check_branch
          %158 = sbr.rel (%p156) target = $region16
        $region15: #{tpu_custom_call.1} parent=11 // pred_region
          %160 = vsyncadd [#allocation6], 0
          %s161 = sshll.u32 %s1, 4
          %s162 = int_to_ptr.hbm [resolvable:$true] %s161
          %s163 = sshll.u32 [#allocation5], 4
          %s164 = int_to_ptr.vmem [resolvable:$true] %s163
          %169 = dma.hbm_to_vmem [thread:$0]  %s162, 6144, %s164, [#allocation6], 384, 384, 24
        $region16: #{tpu_custom_call.1} parent=11 // pred_fallthru
          _
        // Predicated region
        $region17: #{tpu_custom_call.1} parent=11 // pred_check
          %p170 = pneg %p89
        $region18: #{tpu_custom_call.1} parent=11 // pred_check_branch
          %172 = sbr.rel (%p170) target = $region20
        $region19: #{tpu_custom_call.1} parent=11 // pred_region
          %174 = vsyncadd [#allocation6], 0
          %s176 = sshll.u32 %s2, 4
          %s177 = int_to_ptr.hbm [resolvable:$true] %s176
          %s178 = sshll.u32 [#allocation7], 4
          %s179 = int_to_ptr.vmem [resolvable:$true] %s178
          %181 = dma.hbm_to_vmem [thread:$0]  %s177, 48, %s179, [#allocation6]
        $region20: #{tpu_custom_call.1} parent=11 // pred_fallthru
          _
      $region12: #{tpu_custom_call.1} parent=5 // pred_fallthru
        _
      %p182 = scmp.lt.s32.totalorder %s21, 2
      // Predicated region
      $region21: #{tpu_custom_call.1} parent=5 // pred_check
        %p183 = pneg %p182
      $region22: #{tpu_custom_call.1} parent=5 // pred_check_branch
        %185 = sbr.rel (%p183) target = $region24
      $region23: #{tpu_custom_call.1} parent=5 // pred_region
        // Predicated region
        $region25: #{tpu_custom_call.1} parent=23 // pred_check
          %p186 = pneg %p41
        $region26: #{tpu_custom_call.1} parent=23 // pred_check_branch
          %188 = sbr.rel (%p186) target = $region28
        $region27: #{tpu_custom_call.1} parent=23 // pred_region
          %s189 = sand.u32 %s31, 1
          %s190 = scalar_lea.sflag [#allocation3], %s189
          %s191 = sand.u32 %s31, 1
          %s192 = smul.addr %s191, 64
          %s193 = scalar_lea.vmem [#allocation2], %s192
          %s194 = smul.u32 4, %s21
          %196 = vsyncadd %s190, 0
          %s197 = smul.addr %s194, 2
          %s198 = smul.addr %s197, 8
          %s199 = scalar_lea.hbm %s0, %s198
          %s200 = sshll.u32 %s199, 4
          %s201 = int_to_ptr.hbm [resolvable:$true] %s200
          %s202 = sshll.u32 %s193, 4
          %s203 = int_to_ptr.vmem [resolvable:$true] %s202
          %208 = dma.hbm_to_vmem [thread:$0]  %s201, 1024, %s203, %s190, 128, 128, 8
        $region28: #{tpu_custom_call.1} parent=23 // pred_fallthru
          _
      $region24: #{tpu_custom_call.1} parent=5 // pred_fallthru
        _
      %p209 = scmp.le.s32.totalorder 1, %s21
      %p210 = scmp.lt.s32.totalorder %s21, 3
      %p211 = pnand %p209, %p210
      %p212 = pneg %p211
      // Predicated region
      $region29: #{tpu_custom_call.1} parent=5 // pred_check
        _
      $region30: #{tpu_custom_call.1} parent=5 // pred_check_branch
        %214 = sbr.rel (%p211) target = $region32
      $region31: #{tpu_custom_call.1} parent=5 // pred_region
        %s215 = ssub.s32 %s21, 1
        %s216 = sand.u32 %s34, 1
        %s217 = scalar_lea.sflag [#allocation3], %s216
        %s218 = sand.u32 %s34, 1
        %s219 = smul.addr %s218, 64
        %s220 = scalar_lea.vmem [#allocation2], %s219
        // Predicated region
        $region33: #{tpu_custom_call.1} parent=31 // pred_check
          %p221 = pneg %p47
        $region34: #{tpu_custom_call.1} parent=31 // pred_check_branch
          %223 = sbr.rel (%p221) target = $region36
        $region35: #{tpu_custom_call.1} parent=31 // pred_region
          %225 = dma.done %s217, 1024
        $region36: #{tpu_custom_call.1} parent=31 // pred_fallthru
          _
        // Predicated region
        $region37: #{tpu_custom_call.1} parent=31 // pred_check
          %p226 = pneg %p68
        $region38: #{tpu_custom_call.1} parent=31 // pred_check_branch
          %228 = sbr.rel (%p226) target = $region40
        $region39: #{tpu_custom_call.1} parent=31 // pred_region
          %230 = dma.done [#allocation6], 6144
        $region40: #{tpu_custom_call.1} parent=31 // pred_fallthru
          _
        // Predicated region
        $region41: #{tpu_custom_call.1} parent=31 // pred_check
          %p231 = pneg %p89
        $region42: #{tpu_custom_call.1} parent=31 // pred_check_branch
          %233 = sbr.rel (%p231) target = $region44
        $region43: #{tpu_custom_call.1} parent=31 // pred_region
          %235 = dma.done [#allocation6], 48
        $region44: #{tpu_custom_call.1} parent=31 // pred_fallthru
          _
        %s236 = sand.u32 %s34, 1
        %s237 = scalar_lea.sflag [#allocation3], %s236
        %s238 = sand.u32 %s34, 1
        %s239 = smul.addr %s238, 64
        %s240 = scalar_lea.vmem [#allocation2], %s239
        %p241 = pneg %p47
        %p242 = pneg %p44
        %p243 = pneg %p68
        %p244 = pneg %p65
        %p245 = pneg %p89
        %p246 = pneg %p86
        %p247 = pneg %p115
        %p248 = pneg %p112
        %s249 = sand.u32 %s102, 1
        %s250 = scalar_lea.sflag [#allocation4], %s249
        %s251 = sand.u32 %s102, 1
        %s252 = smul.addr %s251, 32
        %s253 = scalar_lea.vmem [#allocation8], %s252
        %p254 = pneg %p141
        %p255 = pneg %p138
        %s256 = sand.u32 %s128, 1
        %s257 = scalar_lea.sflag [#allocation10], %s256
        %s258 = sand.u32 %s128, 1
        %s259 = smul.addr %s258, 64
        %s260 = scalar_lea.vmem [#allocation9], %s259
        %s261 = smul.u32 4, %s26
        %s262 = smul.u32 4, %s26
        %s263 = smul.u32 4, %s26
        %v264 = vld [vmem:[%s220] sm:$0xff]
        %v265 = vld [vmem:[%s220 + $0x8] sm:$0xff]
        %v266 = vld [vmem:[%s220 + $0x10] sm:$0xff]
        %v267 = vld [vmem:[%s220 + $0x18] sm:$0xff]
        %v268 = vld [vmem:[%s220 + $0x20] sm:$0xff]
        %v269 = vld [vmem:[%s220 + $0x28] sm:$0xff]
        %v270 = vld [vmem:[%s220 + $0x30] sm:$0xff]
        %v271 = vld [vmem:[%s220 + $0x38] sm:$0xff]
        %v272 = vld [vmem:[#allocation5] sm:$0xff]
        %v273 = vld [vmem:[#allocation5 + $0x8] sm:$0xff]
        %v274 = vld [vmem:[#allocation5 + $0x10] sm:$0xff]
        %v275 = vld [vmem:[#allocation5 + $0x18] sm:$0xff]
        %v276 = vld [vmem:[#allocation5 + $0x20] sm:$0xff]
        %v277 = vld [vmem:[#allocation5 + $0x28] sm:$0xff]
        %v278 = vld [vmem:[#allocation5 + $0x30] sm:$0xff]
        %v279 = vld [vmem:[#allocation5 + $0x38] sm:$0xff]
        %v280 = vld [vmem:[#allocation5 + $0x40] sm:$0xff]
        %v281 = vld [vmem:[#allocation5 + $0x48] sm:$0xff]
        %v282 = vld [vmem:[#allocation5 + $0x50] sm:$0xff]
        %v283 = vld [vmem:[#allocation5 + $0x58] sm:$0xff]
        %v284 = vld [vmem:[#allocation5 + $0x60] sm:$0xff]
        %v285 = vld [vmem:[#allocation5 + $0x68] sm:$0xff]
        %v286 = vld [vmem:[#allocation5 + $0x70] sm:$0xff]
        %v287 = vld [vmem:[#allocation5 + $0x78] sm:$0xff]
        %v288 = vld [vmem:[#allocation5 + $0x80] sm:$0xff]
        %v289 = vld [vmem:[#allocation5 + $0x88] sm:$0xff]
        %v290 = vld [vmem:[#allocation5 + $0x90] sm:$0xff]
        %v291 = vld [vmem:[#allocation5 + $0x98] sm:$0xff]
        %v292 = vld [vmem:[#allocation5 + $0xa0] sm:$0xff]
        %v293 = vld [vmem:[#allocation5 + $0xa8] sm:$0xff]
        %v294 = vld [vmem:[#allocation5 + $0xb0] sm:$0xff]
        %v295 = vld [vmem:[#allocation5 + $0xb8] sm:$0xff]
        %v296 = vld [vmem:[#allocation5 + $0xc0] sm:$0xff]
        %v297 = vld [vmem:[#allocation5 + $0xc8] sm:$0xff]
        %v298 = vld [vmem:[#allocation5 + $0xd0] sm:$0xff]
        %v299 = vld [vmem:[#allocation5 + $0xd8] sm:$0xff]
        %v300 = vld [vmem:[#allocation5 + $0xe0] sm:$0xff]
        %v301 = vld [vmem:[#allocation5 + $0xe8] sm:$0xff]
        %v302 = vld [vmem:[#allocation5 + $0xf0] sm:$0xff]
        %v303 = vld [vmem:[#allocation5 + $0xf8] sm:$0xff]
        %v304 = vld [vmem:[#allocation5 + $0x100] sm:$0xff]
        %v305 = vld [vmem:[#allocation5 + $0x108] sm:$0xff]
        %v306 = vld [vmem:[#allocation5 + $0x110] sm:$0xff]
        %v307 = vld [vmem:[#allocation5 + $0x118] sm:$0xff]
        %v308 = vld [vmem:[#allocation5 + $0x120] sm:$0xff]
        %v309 = vld [vmem:[#allocation5 + $0x128] sm:$0xff]
        %v310 = vld [vmem:[#allocation5 + $0x130] sm:$0xff]
        %v311 = vld [vmem:[#allocation5 + $0x138] sm:$0xff]
        %v312 = vld [vmem:[#allocation5 + $0x140] sm:$0xff]
        %v313 = vld [vmem:[#allocation5 + $0x148] sm:$0xff]
        %v314 = vld [vmem:[#allocation5 + $0x150] sm:$0xff]
        %v315 = vld [vmem:[#allocation5 + $0x158] sm:$0xff]
        %v316 = vld [vmem:[#allocation5 + $0x160] sm:$0xff]
        %v317 = vld [vmem:[#allocation5 + $0x168] sm:$0xff]
        %v318 = vld [vmem:[#allocation5 + $0x170] sm:$0xff]
        %v319 = vld [vmem:[#allocation5 + $0x178] sm:$0xff]
        %v320 = vld [vmem:[#allocation7] sm:$0x7]
        %v322 = vperm.slane %v320, 0
        %v323 = vperm.slane %v320, 1
        %v324 = vperm.slane %v320, 2
        %328 = vmatpush.msra.mxu0 %v317
        %329 = vmatpush.msra.mxu0 %v314
        %330 = vmatpush.msra.mxu0 %v311
        %331 = vmatpush.msra.mxu0 %v308
        %332 = vmatpush.msra.mxu0 %v305
        %333 = vmatpush.msra.mxu0 %v302
        %334 = vmatpush.msra.mxu0 %v299
        %335 = vmatpush.msra.mxu0 %v296
        %336 = vmatpush.msra.mxu0 %v293
        %337 = vmatpush.msra.mxu0 %v290
        %338 = vmatpush.msra.mxu0 %v287
        %339 = vmatpush.msra.mxu0 %v284
        %340 = vmatpush.msra.mxu0 %v281
        %341 = vmatpush.msra.mxu0 %v278
        %342 = vmatpush.msra.mxu0 %v275
        %343 = vmatpush.msra.mxu0 %v272
        %344 = vmatmul.f32.gmra.mxu0 %v264
        %v345 = vpop.f32.mrf.mxu0
        %v346 = vadd.f32 %v322, %v345
        %347 = vmatmul.f32.gmra.mxu0 %v265
        %v348 = vpop.f32.mrf.mxu0
        %v349 = vadd.f32 %v322, %v348
        %350 = vmatmul.f32.gmra.mxu0 %v266
        %v351 = vpop.f32.mrf.mxu0
        %v352 = vadd.f32 %v322, %v351
        %353 = vmatmul.f32.gmra.mxu0 %v267
        %v354 = vpop.f32.mrf.mxu0
        %v355 = vadd.f32 %v322, %v354
        %356 = vmatmul.f32.gmra.mxu0 %v268
        %v357 = vpop.f32.mrf.mxu0
        %v358 = vadd.f32 %v322, %v357
        %359 = vmatmul.f32.gmra.mxu0 %v269
        %v360 = vpop.f32.mrf.mxu0
        %v361 = vadd.f32 %v322, %v360
        %362 = vmatmul.f32.gmra.mxu0 %v270
        %v363 = vpop.f32.mrf.mxu0
        %v364 = vadd.f32 %v322, %v363
        %365 = vmatmul.f32.gmra.mxu0 %v271
        %v366 = vpop.f32.mrf.mxu0
        %v367 = vadd.f32 %v322, %v366
        %368 = vdwg.mxu0
        %369 = vmatpush.msra.mxu0 %v318
        %370 = vmatpush.msra.mxu0 %v315
        %371 = vmatpush.msra.mxu0 %v312
        %372 = vmatpush.msra.mxu0 %v309
        %373 = vmatpush.msra.mxu0 %v306
        %374 = vmatpush.msra.mxu0 %v303
        %375 = vmatpush.msra.mxu0 %v300
        %376 = vmatpush.msra.mxu0 %v297
        %377 = vmatpush.msra.mxu0 %v294
        %378 = vmatpush.msra.mxu0 %v291
        %379 = vmatpush.msra.mxu0 %v288
        %380 = vmatpush.msra.mxu0 %v285
        %381 = vmatpush.msra.mxu0 %v282
        %382 = vmatpush.msra.mxu0 %v279
        %383 = vmatpush.msra.mxu0 %v276
        %384 = vmatpush.msra.mxu0 %v273
        %385 = vmatmul.f32.gmra.mxu0 %v264
        %v386 = vpop.f32.mrf.mxu0
        %v387 = vadd.f32 %v323, %v386
        %388 = vmatmul.f32.gmra.mxu0 %v265
        %v389 = vpop.f32.mrf.mxu0
        %v390 = vadd.f32 %v323, %v389
        %391 = vmatmul.f32.gmra.mxu0 %v266
        %v392 = vpop.f32.mrf.mxu0
        %v393 = vadd.f32 %v323, %v392
        %394 = vmatmul.f32.gmra.mxu0 %v267
        %v395 = vpop.f32.mrf.mxu0
        %v396 = vadd.f32 %v323, %v395
        %397 = vmatmul.f32.gmra.mxu0 %v268
        %v398 = vpop.f32.mrf.mxu0
        %v399 = vadd.f32 %v323, %v398
        %400 = vmatmul.f32.gmra.mxu0 %v269
        %v401 = vpop.f32.mrf.mxu0
        %v402 = vadd.f32 %v323, %v401
        %403 = vmatmul.f32.gmra.mxu0 %v270
        %v404 = vpop.f32.mrf.mxu0
        %v405 = vadd.f32 %v323, %v404
        %406 = vmatmul.f32.gmra.mxu0 %v271
        %v407 = vpop.f32.mrf.mxu0
        %v408 = vadd.f32 %v323, %v407
        %409 = vdwg.mxu0
        %410 = vmatpush.msra.mxu0 %v319
        %411 = vmatpush.msra.mxu0 %v316
        %412 = vmatpush.msra.mxu0 %v313
        %413 = vmatpush.msra.mxu0 %v310
        %414 = vmatpush.msra.mxu0 %v307
        %415 = vmatpush.msra.mxu0 %v304
        %416 = vmatpush.msra.mxu0 %v301
        %417 = vmatpush.msra.mxu0 %v298
        %418 = vmatpush.msra.mxu0 %v295
        %419 = vmatpush.msra.mxu0 %v292
        %420 = vmatpush.msra.mxu0 %v289
        %421 = vmatpush.msra.mxu0 %v286
        %422 = vmatpush.msra.mxu0 %v283
        %423 = vmatpush.msra.mxu0 %v280
        %424 = vmatpush.msra.mxu0 %v277
        %425 = vmatpush.msra.mxu0 %v274
        %426 = vmatmul.f32.gmra.mxu0 %v264
        %v427 = vpop.f32.mrf.mxu0
        %v428 = vadd.f32 %v324, %v427
        %429 = vmatmul.f32.gmra.mxu0 %v265
        %v430 = vpop.f32.mrf.mxu0
        %v431 = vadd.f32 %v324, %v430
        %432 = vmatmul.f32.gmra.mxu0 %v266
        %v433 = vpop.f32.mrf.mxu0
        %v434 = vadd.f32 %v324, %v433
        %435 = vmatmul.f32.gmra.mxu0 %v267
        %v436 = vpop.f32.mrf.mxu0
        %v437 = vadd.f32 %v324, %v436
        %438 = vmatmul.f32.gmra.mxu0 %v268
        %v439 = vpop.f32.mrf.mxu0
        %v440 = vadd.f32 %v324, %v439
        %441 = vmatmul.f32.gmra.mxu0 %v269
        %v442 = vpop.f32.mrf.mxu0
        %v443 = vadd.f32 %v324, %v442
        %444 = vmatmul.f32.gmra.mxu0 %v270
        %v445 = vpop.f32.mrf.mxu0
        %v446 = vadd.f32 %v324, %v445
        %447 = vmatmul.f32.gmra.mxu0 %v271
        %v448 = vpop.f32.mrf.mxu0
        %v449 = vadd.f32 %v324, %v448
        %450 = vdwg.mxu0
        %451 = vmatpush.xpose.msra.mxu0 0.0
        %452 = vmatpush.xpose.msra.mxu0 0.0
        %453 = vmatpush.xpose.msra.mxu0 0.0
        %454 = vmatpush.xpose.msra.mxu0 0.0
        %455 = vmatpush.xpose.msra.mxu0 0.0
        %456 = vmatpush.xpose.msra.mxu0 0.0
        %457 = vmatpush.xpose.msra.mxu0 0.0
        %458 = vmatpush.xpose.msra.mxu0 0.0
        %459 = vmatpush.xpose.msra.mxu0 0.0
        %460 = vmatpush.xpose.msra.mxu0 0.0
        %461 = vmatpush.xpose.msra.mxu0 0.0
        %462 = vmatpush.xpose.msra.mxu0 0.0
        %463 = vmatpush.xpose.msra.mxu0 0.0
        %464 = vmatpush.xpose.msra.mxu0 0.0
        %465 = vmatpush.xpose.msra.mxu0 %v390
        %466 = vmatpush.xpose.msra.mxu0 %v387
        %467 = vmatmul.f32.gmra.mxu0 %v346
        %v468 = vpop.f32.mrf.mxu0
        %v469 = vadd.f32 0.0, %v468
        %470 = vmatmul.f32.gmra.mxu0 %v349
        %v471 = vpop.f32.mrf.mxu0
        %v472 = vadd.f32 0.0, %v471
        %473 = vdwg.mxu0
        %474 = vmatpush.xpose.msra.mxu0 0.0
        %475 = vmatpush.xpose.msra.mxu0 0.0
        %476 = vmatpush.xpose.msra.mxu0 0.0
        %477 = vmatpush.xpose.msra.mxu0 0.0
        %478 = vmatpush.xpose.msra.mxu0 0.0
        %479 = vmatpush.xpose.msra.mxu0 0.0
        %480 = vmatpush.xpose.msra.mxu0 0.0
        %481 = vmatpush.xpose.msra.mxu0 0.0
        %482 = vmatpush.xpose.msra.mxu0 0.0
        %483 = vmatpush.xpose.msra.mxu0 0.0
        %484 = vmatpush.xpose.msra.mxu0 0.0
        %485 = vmatpush.xpose.msra.mxu0 0.0
        %486 = vmatpush.xpose.msra.mxu0 0.0
        %487 = vmatpush.xpose.msra.mxu0 0.0
        %488 = vmatpush.xpose.msra.mxu0 %v396
        %489 = vmatpush.xpose.msra.mxu0 %v393
        %490 = vmatmul.f32.gmra.mxu0 %v352
        %v491 = vpop.f32.mrf.mxu0
        %v492 = vadd.f32 0.0, %v491
        %493 = vmatmul.f32.gmra.mxu0 %v355
        %v494 = vpop.f32.mrf.mxu0
        %v495 = vadd.f32 0.0, %v494
        %496 = vdwg.mxu0
        %497 = vmatpush.xpose.msra.mxu0 0.0
        %498 = vmatpush.xpose.msra.mxu0 0.0
        %499 = vmatpush.xpose.msra.mxu0 0.0
        %500 = vmatpush.xpose.msra.mxu0 0.0
        %501 = vmatpush.xpose.msra.mxu0 0.0
        %502 = vmatpush.xpose.msra.mxu0 0.0
        %503 = vmatpush.xpose.msra.mxu0 0.0
        %504 = vmatpush.xpose.msra.mxu0 0.0
        %505 = vmatpush.xpose.msra.mxu0 0.0
        %506 = vmatpush.xpose.msra.mxu0 0.0
        %507 = vmatpush.xpose.msra.mxu0 0.0
        %508 = vmatpush.xpose.msra.mxu0 0.0
        %509 = vmatpush.xpose.msra.mxu0 0.0
        %510 = vmatpush.xpose.msra.mxu0 0.0
        %511 = vmatpush.xpose.msra.mxu0 %v402
        %512 = vmatpush.xpose.msra.mxu0 %v399
        %513 = vmatmul.f32.gmra.mxu0 %v358
        %v514 = vpop.f32.mrf.mxu0
        %v515 = vadd.f32 0.0, %v514
        %516 = vmatmul.f32.gmra.mxu0 %v361
        %v517 = vpop.f32.mrf.mxu0
        %v518 = vadd.f32 0.0, %v517
        %519 = vdwg.mxu0
        %520 = vmatpush.xpose.msra.mxu0 0.0
        %521 = vmatpush.xpose.msra.mxu0 0.0
        %522 = vmatpush.xpose.msra.mxu0 0.0
        %523 = vmatpush.xpose.msra.mxu0 0.0
        %524 = vmatpush.xpose.msra.mxu0 0.0
        %525 = vmatpush.xpose.msra.mxu0 0.0
        %526 = vmatpush.xpose.msra.mxu0 0.0
        %527 = vmatpush.xpose.msra.mxu0 0.0
        %528 = vmatpush.xpose.msra.mxu0 0.0
        %529 = vmatpush.xpose.msra.mxu0 0.0
        %530 = vmatpush.xpose.msra.mxu0 0.0
        %531 = vmatpush.xpose.msra.mxu0 0.0
        %532 = vmatpush.xpose.msra.mxu0 0.0
        %533 = vmatpush.xpose.msra.mxu0 0.0
        %534 = vmatpush.xpose.msra.mxu0 %v408
        %535 = vmatpush.xpose.msra.mxu0 %v405
        %536 = vmatmul.f32.gmra.mxu0 %v364
        %v537 = vpop.f32.mrf.mxu0
        %v538 = vadd.f32 0.0, %v537
        %539 = vmatmul.f32.gmra.mxu0 %v367
        %v540 = vpop.f32.mrf.mxu0
        %v541 = vadd.f32 0.0, %v540
        %542 = vdwg.mxu0
        %v543 = vmul.f32 %v469, 0.088388346
        %v544 = vmul.f32 %v472, 0.088388346
        %v545 = vmul.f32 %v492, 0.088388346
        %v546 = vmul.f32 %v495, 0.088388346
        %v547 = vmul.f32 %v515, 0.088388346
        %v548 = vmul.f32 %v518, 0.088388346
        %v549 = vmul.f32 %v538, 0.088388346
        %v550 = vmul.f32 %v541, 0.088388346
        %vm551 = vcmask 130048
        %v552 = vsel %vm551, %v543, -inf
        %553 = vmax.xlane.f32.xlu0 %v552
        %v554 = vpop.xlane.xlu0 %553
        %v555 = vsel %vm551, %v544, -inf
        %556 = vmax.xlane.f32.xlu0 %v555
        %v557 = vpop.xlane.xlu0 %556
        %v558 = vsel %vm551, %v545, -inf
        %559 = vmax.xlane.f32.xlu0 %v558
        %v560 = vpop.xlane.xlu0 %559
        %v561 = vsel %vm551, %v546, -inf
        %562 = vmax.xlane.f32.xlu0 %v561
        %v563 = vpop.xlane.xlu0 %562
        %v564 = vsel %vm551, %v547, -inf
        %565 = vmax.xlane.f32.xlu0 %v564
        %v566 = vpop.xlane.xlu0 %565
        %v567 = vsel %vm551, %v548, -inf
        %568 = vmax.xlane.f32.xlu0 %v567
        %v569 = vpop.xlane.xlu0 %568
        %v570 = vsel %vm551, %v549, -inf
        %571 = vmax.xlane.f32.xlu0 %v570
        %v572 = vpop.xlane.xlu0 %571
        %v573 = vsel %vm551, %v550, -inf
        %574 = vmax.xlane.f32.xlu0 %v573
        %v575 = vpop.xlane.xlu0 %574
        %v576 = vsub.f32 %v543, %v554
        %v577 = vsub.f32 %v544, %v557
        %v578 = vsub.f32 %v545, %v560
        %v579 = vsub.f32 %v546, %v563
        %v580 = vsub.f32 %v547, %v566
        %v581 = vsub.f32 %v548, %v569
        %v582 = vsub.f32 %v549, %v572
        %v583 = vsub.f32 %v550, %v575
        %v584 = vmul.f32 %v576, 1.442695
        %v585 = vpow.pop %v584
        %v586 = vmul.f32 %v577, 1.442695
        %v587 = vpow.pop %v586
        %v588 = vmul.f32 %v578, 1.442695
        %v589 = vpow.pop %v588
        %v590 = vmul.f32 %v579, 1.442695
        %v591 = vpow.pop %v590
        %v592 = vmul.f32 %v580, 1.442695
        %v593 = vpow.pop %v592
        %v594 = vmul.f32 %v581, 1.442695
        %v595 = vpow.pop %v594
        %v596 = vmul.f32 %v582, 1.442695
        %v597 = vpow.pop %v596
        %v598 = vmul.f32 %v583, 1.442695
        %v599 = vpow.pop %v598
        %v600 = vsel %vm551, %v585, 0.0
        %601 = vadd.xlane.f32.xlu0 %v600
        %v602 = vpop.xlane.xlu0 %601
        %v603 = vsel %vm551, %v587, 0.0
        %604 = vadd.xlane.f32.xlu0 %v603
        %v605 = vpop.xlane.xlu0 %604
        %v606 = vsel %vm551, %v589, 0.0
        %607 = vadd.xlane.f32.xlu0 %v606
        %v608 = vpop.xlane.xlu0 %607
        %v609 = vsel %vm551, %v591, 0.0
        %610 = vadd.xlane.f32.xlu0 %v609
        %v611 = vpop.xlane.xlu0 %610
        %v612 = vsel %vm551, %v593, 0.0
        %613 = vadd.xlane.f32.xlu0 %v612
        %v614 = vpop.xlane.xlu0 %613
        %v615 = vsel %vm551, %v595, 0.0
        %616 = vadd.xlane.f32.xlu0 %v615
        %v617 = vpop.xlane.xlu0 %616
        %v618 = vsel %vm551, %v597, 0.0
        %619 = vadd.xlane.f32.xlu0 %v618
        %v620 = vpop.xlane.xlu0 %619
        %v621 = vsel %vm551, %v599, 0.0
        %622 = vadd.xlane.f32.xlu0 %v621
        %v623 = vpop.xlane.xlu0 %622
        %v624 = vrcp.pop %v602
        %v625 = vmul.f32 %v602, %v624
        %v626 = vsub.f32 1.0, %v625
        %v627 = vmul.f32 %v624, %v626
        %v628 = vadd.f32 %v624, %v627
        %vm629 = vweird.f32 %v602
        %vm630 = vweird.f32 %v624
        %vm631 = vmor %vm629, %vm630
        %v632 = vsel %vm631, %v624, %v628
        %v633 = vand.u32 2147483647, %v602
        %vm634 = vcmp.eq.f32.partialorder %v633, 8.507059e+37
        %v635 = vand.u32 %v602, 2147483648
        %v636 = vor.u32 1.1754944e-38, %v635
        %v637 = vsel %vm634, %v636, %v632
        %v638 = vmul.f32 %v585, %v637
        %v639 = vrcp.pop %v605
        %v640 = vmul.f32 %v605, %v639
        %v641 = vsub.f32 1.0, %v640
        %v642 = vmul.f32 %v639, %v641
        %v643 = vadd.f32 %v639, %v642
        %vm644 = vweird.f32 %v605
        %vm645 = vweird.f32 %v639
        %vm646 = vmor %vm644, %vm645
        %v647 = vsel %vm646, %v639, %v643
        %v648 = vand.u32 2147483647, %v605
        %vm649 = vcmp.eq.f32.partialorder %v648, 8.507059e+37
        %v650 = vand.u32 %v605, 2147483648
        %v651 = vor.u32 1.1754944e-38, %v650
        %v652 = vsel %vm649, %v651, %v647
        %v653 = vmul.f32 %v587, %v652
        %v654 = vrcp.pop %v608
        %v655 = vmul.f32 %v608, %v654
        %v656 = vsub.f32 1.0, %v655
        %v657 = vmul.f32 %v654, %v656
        %v658 = vadd.f32 %v654, %v657
        %vm659 = vweird.f32 %v608
        %vm660 = vweird.f32 %v654
        %vm661 = vmor %vm659, %vm660
        %v662 = vsel %vm661, %v654, %v658
        %v663 = vand.u32 2147483647, %v608
        %vm664 = vcmp.eq.f32.partialorder %v663, 8.507059e+37
        %v665 = vand.u32 %v608, 2147483648
        %v666 = vor.u32 1.1754944e-38, %v665
        %v667 = vsel %vm664, %v666, %v662
        %v668 = vmul.f32 %v589, %v667
        %v669 = vrcp.pop %v611
        %v670 = vmul.f32 %v611, %v669
        %v671 = vsub.f32 1.0, %v670
        %v672 = vmul.f32 %v669, %v671
        %v673 = vadd.f32 %v669, %v672
        %vm674 = vweird.f32 %v611
        %vm675 = vweird.f32 %v669
        %vm676 = vmor %vm674, %vm675
        %v677 = vsel %vm676, %v669, %v673
        %v678 = vand.u32 2147483647, %v611
        %vm679 = vcmp.eq.f32.partialorder %v678, 8.507059e+37
        %v680 = vand.u32 %v611, 2147483648
        %v681 = vor.u32 1.1754944e-38, %v680
        %v682 = vsel %vm679, %v681, %v677
        %v683 = vmul.f32 %v591, %v682
        %v684 = vrcp.pop %v614
        %v685 = vmul.f32 %v614, %v684
        %v686 = vsub.f32 1.0, %v685
        %v687 = vmul.f32 %v684, %v686
        %v688 = vadd.f32 %v684, %v687
        %vm689 = vweird.f32 %v614
        %vm690 = vweird.f32 %v684
        %vm691 = vmor %vm689, %vm690
        %v692 = vsel %vm691, %v684, %v688
        %v693 = vand.u32 2147483647, %v614
        %vm694 = vcmp.eq.f32.partialorder %v693, 8.507059e+37
        %v695 = vand.u32 %v614, 2147483648
        %v696 = vor.u32 1.1754944e-38, %v695
        %v697 = vsel %vm694, %v696, %v692
        %v698 = vmul.f32 %v593, %v697
        %v699 = vrcp.pop %v617
        %v700 = vmul.f32 %v617, %v699
        %v701 = vsub.f32 1.0, %v700
        %v702 = vmul.f32 %v699, %v701
        %v703 = vadd.f32 %v699, %v702
        %vm704 = vweird.f32 %v617
        %vm705 = vweird.f32 %v699
        %vm706 = vmor %vm704, %vm705
        %v707 = vsel %vm706, %v699, %v703
        %v708 = vand.u32 2147483647, %v617
        %vm709 = vcmp.eq.f32.partialorder %v708, 8.507059e+37
        %v710 = vand.u32 %v617, 2147483648
        %v711 = vor.u32 1.1754944e-38, %v710
        %v712 = vsel %vm709, %v711, %v707
        %v713 = vmul.f32 %v595, %v712
        %v714 = vrcp.pop %v620
        %v715 = vmul.f32 %v620, %v714
        %v716 = vsub.f32 1.0, %v715
        %v717 = vmul.f32 %v714, %v716
        %v718 = vadd.f32 %v714, %v717
        %vm719 = vweird.f32 %v620
        %vm720 = vweird.f32 %v714
        %vm721 = vmor %vm719, %vm720
        %v722 = vsel %vm721, %v714, %v718
        %v723 = vand.u32 2147483647, %v620
        %vm724 = vcmp.eq.f32.partialorder %v723, 8.507059e+37
        %v725 = vand.u32 %v620, 2147483648
        %v726 = vor.u32 1.1754944e-38, %v725
        %v727 = vsel %vm724, %v726, %v722
        %v728 = vmul.f32 %v597, %v727
        %v729 = vrcp.pop %v623
        %v730 = vmul.f32 %v623, %v729
        %v731 = vsub.f32 1.0, %v730
        %v732 = vmul.f32 %v729, %v731
        %v733 = vadd.f32 %v729, %v732
        %vm734 = vweird.f32 %v623
        %vm735 = vweird.f32 %v729
        %vm736 = vmor %vm734, %vm735
        %v737 = vsel %vm736, %v729, %v733
        %v738 = vand.u32 2147483647, %v623
        %vm739 = vcmp.eq.f32.partialorder %v738, 8.507059e+37
        %v740 = vand.u32 %v623, 2147483648
        %v741 = vor.u32 1.1754944e-38, %v740
        %v742 = vsel %vm739, %v741, %v737
        %v743 = vmul.f32 %v599, %v742
        %v745 = vsel %vm551, %v638, 0
        %v748 = vsel %vm551, %v653, 0
        %750 = vmatpush.msra.mxu0 0.0
        %751 = vmatpush.msra.mxu0 0.0
        %752 = vmatpush.msra.mxu0 0.0
        %753 = vmatpush.msra.mxu0 0.0
        %754 = vmatpush.msra.mxu0 0.0
        %755 = vmatpush.msra.mxu0 0.0
        %756 = vmatpush.msra.mxu0 0.0
        %757 = vmatpush.msra.mxu0 0.0
        %758 = vmatpush.msra.mxu0 0.0
        %759 = vmatpush.msra.mxu0 0.0
        %760 = vmatpush.msra.mxu0 0.0
        %761 = vmatpush.msra.mxu0 0.0
        %762 = vmatpush.msra.mxu0 0.0
        %763 = vmatpush.msra.mxu0 0.0
        %764 = vmatpush.msra.mxu0 %v431
        %765 = vmatpush.msra.mxu0 %v428
        %766 = vmatmul.f32.gmra.mxu0 %v745
        %v767 = vpop.f32.mrf.mxu0
        %v768 = vadd.f32 0.0, %v767
        %769 = vmatmul.f32.gmra.mxu0 %v748
        %v770 = vpop.f32.mrf.mxu0
        %v771 = vadd.f32 0.0, %v770
        %772 = vdwg.mxu0
        %v774 = vsel %vm551, %v668, 0
        %v777 = vsel %vm551, %v683, 0
        %779 = vmatpush.msra.mxu0 0.0
        %780 = vmatpush.msra.mxu0 0.0
        %781 = vmatpush.msra.mxu0 0.0
        %782 = vmatpush.msra.mxu0 0.0
        %783 = vmatpush.msra.mxu0 0.0
        %784 = vmatpush.msra.mxu0 0.0
        %785 = vmatpush.msra.mxu0 0.0
        %786 = vmatpush.msra.mxu0 0.0
        %787 = vmatpush.msra.mxu0 0.0
        %788 = vmatpush.msra.mxu0 0.0
        %789 = vmatpush.msra.mxu0 0.0
        %790 = vmatpush.msra.mxu0 0.0
        %791 = vmatpush.msra.mxu0 0.0
        %792 = vmatpush.msra.mxu0 0.0
        %793 = vmatpush.msra.mxu0 %v437
        %794 = vmatpush.msra.mxu0 %v434
        %795 = vmatmul.f32.gmra.mxu0 %v774
        %v796 = vpop.f32.mrf.mxu0
        %v797 = vadd.f32 0.0, %v796
        %798 = vmatmul.f32.gmra.mxu0 %v777
        %v799 = vpop.f32.mrf.mxu0
        %v800 = vadd.f32 0.0, %v799
        %801 = vdwg.mxu0
        %v803 = vsel %vm551, %v698, 0
        %v806 = vsel %vm551, %v713, 0
        %808 = vmatpush.msra.mxu0 0.0
        %809 = vmatpush.msra.mxu0 0.0
        %810 = vmatpush.msra.mxu0 0.0
        %811 = vmatpush.msra.mxu0 0.0
        %812 = vmatpush.msra.mxu0 0.0
        %813 = vmatpush.msra.mxu0 0.0
        %814 = vmatpush.msra.mxu0 0.0
        %815 = vmatpush.msra.mxu0 0.0
        %816 = vmatpush.msra.mxu0 0.0
        %817 = vmatpush.msra.mxu0 0.0
        %818 = vmatpush.msra.mxu0 0.0
        %819 = vmatpush.msra.mxu0 0.0
        %820 = vmatpush.msra.mxu0 0.0
        %821 = vmatpush.msra.mxu0 0.0
        %822 = vmatpush.msra.mxu0 %v443
        %823 = vmatpush.msra.mxu0 %v440
        %824 = vmatmul.f32.gmra.mxu0 %v803
        %v825 = vpop.f32.mrf.mxu0
        %v826 = vadd.f32 0.0, %v825
        %827 = vmatmul.f32.gmra.mxu0 %v806
        %v828 = vpop.f32.mrf.mxu0
        %v829 = vadd.f32 0.0, %v828
        %830 = vdwg.mxu0
        %v832 = vsel %vm551, %v728, 0
        %v835 = vsel %vm551, %v743, 0
        %837 = vmatpush.msra.mxu0 0.0
        %838 = vmatpush.msra.mxu0 0.0
        %839 = vmatpush.msra.mxu0 0.0
        %840 = vmatpush.msra.mxu0 0.0
        %841 = vmatpush.msra.mxu0 0.0
        %842 = vmatpush.msra.mxu0 0.0
        %843 = vmatpush.msra.mxu0 0.0
        %844 = vmatpush.msra.mxu0 0.0
        %845 = vmatpush.msra.mxu0 0.0
        %846 = vmatpush.msra.mxu0 0.0
        %847 = vmatpush.msra.mxu0 0.0
        %848 = vmatpush.msra.mxu0 0.0
        %849 = vmatpush.msra.mxu0 0.0
        %850 = vmatpush.msra.mxu0 0.0
        %851 = vmatpush.msra.mxu0 %v449
        %852 = vmatpush.msra.mxu0 %v446
        %853 = vmatmul.f32.gmra.mxu0 %v832
        %v854 = vpop.f32.mrf.mxu0
        %v855 = vadd.f32 0.0, %v854
        %856 = vmatmul.f32.gmra.mxu0 %v835
        %v857 = vpop.f32.mrf.mxu0
        %v858 = vadd.f32 0.0, %v857
        %859 = vdwg.mxu0
        %v860 = vpack.c.bf16 %v768, %v768
        %v861 = vpack.c.bf16 %v771, %v771
        %v862 = vpack.c.bf16 %v797, %v797
        %v863 = vpack.c.bf16 %v800, %v800
        %v864 = vpack.c.bf16 %v826, %v826
        %v865 = vpack.c.bf16 %v829, %v829
        %v866 = vpack.c.bf16 %v855, %v855
        %v867 = vpack.c.bf16 %v858, %v858
        %868 = vst [vmem:[%s253] sm:$0xf] %v860
        %869 = vst [vmem:[%s253 + $0x4] sm:$0xf] %v861
        %870 = vst [vmem:[%s253 + $0x8] sm:$0xf] %v862
        %871 = vst [vmem:[%s253 + $0xc] sm:$0xf] %v863
        %872 = vst [vmem:[%s253 + $0x10] sm:$0xf] %v864
        %873 = vst [vmem:[%s253 + $0x14] sm:$0xf] %v865
        %874 = vst [vmem:[%s253 + $0x18] sm:$0xf] %v866
        %875 = vst [vmem:[%s253 + $0x1c] sm:$0xf] %v867
        %876 = vst.msk [vmem:[%s260] sm:$0xff] %vm551, %v638
        %877 = vst.msk [vmem:[%s260 + $0x8] sm:$0xff] %vm551, %v653
        %878 = vst.msk [vmem:[%s260 + $0x10] sm:$0xff] %vm551, %v668
        %879 = vst.msk [vmem:[%s260 + $0x18] sm:$0xff] %vm551, %v683
        %880 = vst.msk [vmem:[%s260 + $0x20] sm:$0xff] %vm551, %v698
        %881 = vst.msk [vmem:[%s260 + $0x28] sm:$0xff] %vm551, %v713
        %882 = vst.msk [vmem:[%s260 + $0x30] sm:$0xff] %vm551, %v728
        %883 = vst.msk [vmem:[%s260 + $0x38] sm:$0xff] %vm551, %v743
        %s884 = sand.u32 %s102, 1
        %s885 = scalar_lea.sflag [#allocation4], %s884
        %s886 = sand.u32 %s102, 1
        %s887 = smul.addr %s886, 32
        %s888 = scalar_lea.vmem [#allocation8], %s887
        %s889 = sand.u32 %s128, 1
        %s890 = scalar_lea.sflag [#allocation10], %s889
        %s891 = sand.u32 %s128, 1
        %s892 = smul.addr %s891, 64
        %s893 = scalar_lea.vmem [#allocation9], %s892
        // Predicated region
        $region45: #{tpu_custom_call.1} parent=31 // pred_check
          %p894 = pneg %p112
        $region46: #{tpu_custom_call.1} parent=31 // pred_check_branch
          %896 = sbr.rel (%p894) target = $region48
        $region47: #{tpu_custom_call.1} parent=31 // pred_region
          %s897 = smul.u32 4, %s26
          %899 = vsyncadd %s885, 0
          %s900 = smul.addr %s897, 2
          %s901 = smul.addr %s900, 4
          %s902 = scalar_lea.hbm %s3, %s901
          %s903 = sshll.u32 %s888, 4
          %s904 = int_to_ptr.vmem [resolvable:$true] %s903
          %s905 = sshll.u32 %s902, 4
          %s906 = int_to_ptr.hbm [resolvable:$true] %s905
          %911 = dma.vmem_to_hbm [thread:$0]  %s904, 512, %s906, %s885, 64, 64, 4
        $region48: #{tpu_custom_call.1} parent=31 // pred_fallthru
          _
        // Predicated region
        $region49: #{tpu_custom_call.1} parent=31 // pred_check
          %p912 = pneg %p138
        $region50: #{tpu_custom_call.1} parent=31 // pred_check_branch
          %914 = sbr.rel (%p912) target = $region52
        $region51: #{tpu_custom_call.1} parent=31 // pred_region
          %s915 = smul.u32 4, %s26
          %917 = vsyncadd %s890, 0
          %s918 = smul.addr %s915, 2
          %s919 = smul.addr %s918, 8
          %s920 = scalar_lea.hbm %s4, %s919
          %s921 = sshll.u32 %s893, 4
          %s922 = int_to_ptr.vmem [resolvable:$true] %s921
          %s923 = sshll.u32 %s920, 4
          %s924 = int_to_ptr.hbm [resolvable:$true] %s923
          %929 = dma.vmem_to_hbm [thread:$0]  %s922, 1024, %s924, %s890, 128, 128, 8
        $region52: #{tpu_custom_call.1} parent=31 // pred_fallthru
          _
      $region32: #{tpu_custom_call.1} parent=5 // pred_fallthru
        _
      %p930 = scmp.le.s32.totalorder 2, %s21
      // Predicated region
      $region53: #{tpu_custom_call.1} parent=5 // pred_check
        %p931 = pneg %p930
      $region54: #{tpu_custom_call.1} parent=5 // pred_check_branch
        %933 = sbr.rel (%p931) target = $region56
      $region55: #{tpu_custom_call.1} parent=5 // pred_region
        %s934 = ssub.s32 %s21, 2
        // Predicated region
        $region57: #{tpu_custom_call.1} parent=55 // pred_check
          %p935 = pneg %p118
        $region58: #{tpu_custom_call.1} parent=55 // pred_check_branch
          %937 = sbr.rel (%p935) target = $region60
        $region59: #{tpu_custom_call.1} parent=55 // pred_region
          %s938 = sand.u32 %s103, 1
          %s939 = scalar_lea.sflag [#allocation4], %s938
          %s940 = sand.u32 %s103, 1
          %s941 = smul.addr %s940, 32
          %s942 = scalar_lea.vmem [#allocation8], %s941
          %944 = dma.done %s939, 512
        $region60: #{tpu_custom_call.1} parent=55 // pred_fallthru
          _
        // Predicated region
        $region61: #{tpu_custom_call.1} parent=55 // pred_check
          %p945 = pneg %p144
        $region62: #{tpu_custom_call.1} parent=55 // pred_check_branch
          %947 = sbr.rel (%p945) target = $region64
        $region63: #{tpu_custom_call.1} parent=55 // pred_region
          %s948 = sand.u32 %s129, 1
          %s949 = scalar_lea.sflag [#allocation10], %s948
          %s950 = sand.u32 %s129, 1
          %s951 = smul.addr %s950, 64
          %s952 = scalar_lea.vmem [#allocation9], %s951
          %954 = dma.done %s949, 1024
        $region64: #{tpu_custom_call.1} parent=55 // pred_fallthru
          _
      $region56: #{tpu_custom_call.1} parent=5 // pred_fallthru
        _
    $region6: #{tpu_custom_call.1} parent=1 // loop_footer
      %s25 = sadd.s32 1, %s21
    $region7: #{tpu_custom_call.1} parent=1 // loop_footer_branch
      %20 = sbr.rel target = $region3
    $region8: #{tpu_custom_call.1} parent=1 // loop_exit
      _
    %955 = vsyncpa [#allocation3], 1
    %s956 = scalar_lea.sflag [#allocation3], 1
    %957 = vsyncpa %s956, 1
    %958 = vsyncpa [#allocation6], 1
    %959 = vsyncpa [#allocation4], 1
    %s960 = scalar_lea.sflag [#allocation4], 1
    %961 = vsyncpa %s960, 1
    %962 = vsyncpa [#allocation10], 1
    %s963 = scalar_lea.sflag [#allocation10], 1
    %964 = vsyncpa %s963, 1

</llo_original>
